<compile_context>
chip_gen: v7x
topology: tpu7x:2x2x1
jax: 0.10.0
libtpu: 0.0.40
codegen_flags: <defaults>
</compile_context>

<pallas_src>
import jax
import jax.numpy as jnp
from jax.experimental import pallas as pl
from jax.experimental.pallas import tpu as pltpu


# ----------------------------- Pallas kernel -------------------------------

def _focus_conv_kernel(x_ref, w_ref, shift_ref, o_ref):
    # x_ref:     (tm, G*Cin4)        bf16 grouped rows of the space-to-depth image
    # w_ref:     (G*Cin4, G*Cout)    bf16 block-diagonal weight, BN scale folded in
    # shift_ref: (1, G*Cout)         f32 folded BN shift, tiled G times
    # o_ref:     (tm, G*Cout)        f32 output (lane-dense: G*Cout is a multiple of 128)
    y = jnp.dot(x_ref[...], w_ref[...], preferred_element_type=jnp.float32)
    y = y + shift_ref[...]                                   # BatchNorm (eval, folded)
    sig = pl.reciprocal(1.0 + jnp.exp(-y), approx=False)     # sigmoid via EUP exp + recip
    o_ref[...] = (y * sig).astype(o_ref.dtype)               # SiLU


def _pick_tm(mg, max_tm=2048):
    """Pick the grouped-row tile. Big tiles amortize per-step pipeline overhead;
    split into >=2 blocks when cheap so the v7x megacore can use both TensorCores."""
    if mg > max_tm:
        return max_tm                      # multiple of 16; ragged last block is fine
    half = mg // 2
    if mg >= 32 and half % 16 == 0:
        return half                        # >= 2 parallel blocks
    return mg                              # single full-extent block


def _focus_conv_matmul(xg, w_bd, shift_g):
    """xg: (Mg, Kg) bf16, w_bd: (Kg, Ng) bf16, shift_g: (1, Ng) f32 -> (Mg, Ng) f32."""
    Mg, Kg = xg.shape
    Ng = w_bd.shape[1]
    tm = _pick_tm(Mg)
    grid = (pl.cdiv(Mg, tm),)

    cost = pl.CostEstimate(
        flops=2 * Mg * Kg * Ng,
        transcendentals=Mg * Ng,
        bytes_accessed=(Mg * Kg * xg.dtype.itemsize
                        + Kg * Ng * w_bd.dtype.itemsize
                        + Ng * 4
                        + Mg * Ng * 4),
    )

    return pl.pallas_call(
        _focus_conv_kernel,
        out_shape=jax.ShapeDtypeStruct((Mg, Ng), jnp.float32),
        grid_spec=pltpu.PrefetchScalarGridSpec(
            num_scalar_prefetch=0,
            grid=grid,
            in_specs=[
                pl.BlockSpec((tm, Kg), lambda i: (i, 0)),
                pl.BlockSpec((Kg, Ng), lambda i: (0, 0)),
                pl.BlockSpec((1, Ng), lambda i: (0, 0)),
            ],
            out_specs=pl.BlockSpec((tm, Ng), lambda i: (i, 0)),
        ),
        compiler_params=pltpu.CompilerParams(
            dimension_semantics=("parallel",)),
        cost_estimate=cost,
    )(xg, w_bd, shift_g)


# ------------------------------ Focus module --------------------------------

def focus_forward(x_nchw, params, *, compute_dtype=jnp.bfloat16):
    """Replicates Focus.forward (ksize=1, stride=1, act='silu', BN in eval mode)."""
    N, C, H, W = x_nchw.shape
    H2, W2 = H // 2, W // 2
    C4 = 4 * C
    w = params["conv_w"]
    Cout = w.shape[0]

    # --- space-to-depth in ONE fused copy --------------------------------------
    # (N,C,H,W) -> (N,H2,W2,C,2,2) -> (M, 4C) with feature index f = c*4 + dh*2 + dw.
    x2d = (x_nchw.reshape(N, C, H2, 2, W2, 2)
                 .transpose(0, 2, 4, 1, 3, 5)
                 .reshape(N * H2 * W2, C4)
                 .astype(compute_dtype))

    # --- fold eval-mode BN into the weight; permute rows into (c,dh,dw) order ---
    gamma, beta = params["bn_gamma"], params["bn_beta"]
    mean, var, eps = params["bn_mean"], params["bn_var"], params["bn_eps"]
    scale = gamma * jax.lax.rsqrt(var + eps)
    shift = beta - mean * scale
    w_t = (w.reshape(Cout, C4) * scale[:, None]).T        # (C4, Cout), torch-cat row order

    f = jnp.arange(C4)
    c, dh, dw = f // 4, (f // 2) % 2, f % 2
    perm = (2 * dw + dh) * C + c                          # torch.cat((tl, bl, tr, br)) index
    w_perm = w_t[perm]                                    # rows now in (c, dh, dw) order

    # --- group G rows -> block-diagonal weight so output stores are lane-dense ---
    M = N * H2 * W2
    G = next(g for g in (8, 4, 2, 1) if M % g == 0)
    Mg = M // G
    xg = x2d.reshape(Mg, G * C4)
    w_bd = jnp.kron(jnp.eye(G, dtype=w_perm.dtype), w_perm).astype(compute_dtype)
    shift_g = jnp.tile(shift.reshape(1, Cout), (1, G)).astype(jnp.float32)

    y_g = _focus_conv_matmul(xg, w_bd, shift_g)           # (Mg, G*Cout) f32

    # (Mg, G*Cout) is exactly contiguous NHWC; transpose back to NCHW only for API
    # parity with PyTorch (NHWC consumers should use y_g.reshape(N,H2,W2,Cout) directly).
    return y_g.reshape(N, H2, W2, Cout).transpose(0, 3, 1, 2)


def focus_reference(x_nchw, params, conv_dtype=jnp.float32):
    """Plain-JAX module math (torch.cat channel order, 1x1 conv + eval-BN + SiLU).

    conv_dtype=bfloat16 reproduces the kernel's operand rounding (accumulation stays
    f32) so the Pallas path can be checked with a tight tolerance; conv_dtype=float32
    is the exact PyTorch-module semantics."""
    tl = x_nchw[..., ::2, ::2]
    tr = x_nchw[..., ::2, 1::2]
    bl = x_nchw[..., 1::2, ::2]
    br = x_nchw[..., 1::2, 1::2]
    xc = jnp.concatenate((tl, bl, tr, br), axis=1)        # (N, 4C, H2, W2)

    w = params["conv_w"]
    Cout = w.shape[0]
    gamma, beta = params["bn_gamma"], params["bn_beta"]
    mean, var, eps = params["bn_mean"], params["bn_var"], params["bn_eps"]
    scale = gamma * jax.lax.rsqrt(var + eps)
    shift = beta - mean * scale

    w_folded = (w.reshape(Cout, -1) * scale[:, None]).astype(conv_dtype).astype(jnp.float32)
    xc = xc.astype(conv_dtype).astype(jnp.float32)
    y = jax.lax.conv_general_dilated(
        xc, w_folded[:, :, None, None], window_strides=(1, 1), padding="VALID",
        dimension_numbers=("NCHW", "OIHW", "NCHW"))
    y = y + shift[None, :, None, None]
    return y * jax.nn.sigmoid(y)


def init_focus_params(key, in_channels, out_channels):
    """Deterministic synthetic parameters matching Focus(in_channels, out_channels, ksize=1)."""
    c4 = in_channels * 4
    k_w, k_g, k_b, k_m, k_v = jax.random.split(key, 5)
    return {
        "conv_w": 0.1 * jax.random.normal(k_w, (out_channels, c4, 1, 1), jnp.float32),
        "bn_gamma": 1.0 + 0.05 * jax.random.normal(k_g, (out_channels,), jnp.float32),
        "bn_beta": 0.05 * jax.random.normal(k_b, (out_channels,), jnp.float32),
        # eval-mode running stats (BatchNorm2d inference semantics)
        "bn_mean": 0.05 * jax.random.normal(k_m, (out_channels,), jnp.float32),
        "bn_var": 1.0 + 0.1 * jax.nn.softplus(jax.random.normal(k_v, (out_channels,), jnp.float32)),
        "bn_eps": 1e-5,
    }


if __name__ == "__main__":
    key = jax.random.PRNGKey(0)
    k_x, k_p = jax.random.split(key)

    N, C, H, W = 2, 4, 16, 16
    Cout = 32
    x = jax.random.normal(k_x, (N, C, H, W), jnp.float32)
    params = init_focus_params(k_p, C, Cout)

    out = jax.block_until_ready(focus_forward(x, params))
    ref_bf16 = jax.block_until_ready(focus_reference(x, params, conv_dtype=jnp.bfloat16))
    ref_f32 = jax.block_until_ready(focus_reference(x, params, conv_dtype=jnp.float32))

    assert out.shape == (N, Cout, H // 2, W // 2), out.shape
    err_tight = float(jnp.max(jnp.abs(out - ref_bf16)))   # same operand rounding -> tight
    err_loose = float(jnp.max(jnp.abs(out - ref_f32)))    # exact f32 module math -> bf16 noise
    assert err_tight < 1e-3, f"tight check failed: {err_tight}"
    assert err_loose < 5e-2, f"loose check failed: {err_loose}"

    print("KERNEL_OK")
</pallas_src>

<mosaic_0001>
module attributes {stable_mosaic.version = 11 : i64} {
  func.func @_focus_conv_kernel(%arg0: i32, %arg1: memref<16x128xbf16, #tpu.memory_space<vmem>>, %arg2: memref<128x256xbf16, #tpu.memory_space<vmem>>, %arg3: memref<1x256xf32, #tpu.memory_space<vmem>>, %arg4: memref<16x256xf32, #tpu.memory_space<vmem>>) attributes {dimension_semantics = [#tpu.dimension_semantics<parallel>], iteration_bounds = array<i64: 1>, scalar_prefetch = 0 : i64, scratch_operands = 0 : i64, tpu.core_type = #tpu.core_type<tc>, window_params = [{transform_indices = @transform_0, window_bounds = array<i64: 16, 128>}, {pipeline_mode = #tpu.pipeline_mode<synchronous>, transform_indices = @transform_1, window_bounds = array<i64: 128, 256>}, {pipeline_mode = #tpu.pipeline_mode<synchronous>, transform_indices = @transform_2, window_bounds = array<i64: 1, 256>}, {transform_indices = @transform_3, window_bounds = array<i64: 16, 256>}]} {
    %c0 = arith.constant 0 : index
    %c0_0 = arith.constant 0 : index
    %0 = vector.load %arg1[%c0, %c0_0] : memref<16x128xbf16, #tpu.memory_space<vmem>>, vector<16x128xbf16>
    %c0_1 = arith.constant 0 : index
    %c0_2 = arith.constant 0 : index
    %1 = vector.load %arg2[%c0_1, %c0_2] : memref<128x256xbf16, #tpu.memory_space<vmem>>, vector<128x256xbf16>
    %cst = arith.constant dense<0.000000e+00> : vector<16x256xf32>
    %2 = tpu.matmul %0, %1, %cst {dimension_numbers = #tpu.dot_dimension_numbers<[1], [0], [0], [1], [0, 0, 1, 1], [], []>} : vector<16x128xbf16>, vector<128x256xbf16>, vector<16x256xf32> -> vector<16x256xf32>
    %c0_3 = arith.constant 0 : index
    %c0_4 = arith.constant 0 : index
    %3 = vector.load %arg3[%c0_3, %c0_4] : memref<1x256xf32, #tpu.memory_space<vmem>>, vector<1x256xf32>
    %4 = vector.broadcast %3 : vector<1x256xf32> to vector<16x256xf32>
    %5 = arith.addf %2, %4 : vector<16x256xf32>
    %cst_5 = arith.constant 0.000000e+00 : f32
    %6 = vector.broadcast %cst_5 : f32 to vector<16x256xf32>
    %7 = arith.subf %6, %5 : vector<16x256xf32>
    %8 = math.exp %7 : vector<16x256xf32>
    %cst_6 = arith.constant 1.000000e+00 : f32
    %9 = vector.broadcast %cst_6 : f32 to vector<16x256xf32>
    %10 = arith.addf %9, %8 : vector<16x256xf32>
    %11 = tpu.reciprocal %10 : vector<16x256xf32> -> vector<16x256xf32>
    %12 = arith.mulf %5, %11 : vector<16x256xf32>
    %c0_7 = arith.constant 0 : index
    %c0_8 = arith.constant 0 : index
    %13 = vector.load %arg4[%c0_7, %c0_8] : memref<16x256xf32, #tpu.memory_space<vmem>>, vector<16x256xf32>
    tpu.vector_store %arg4[%c0_7, %c0_8], %12 {strides = array<i32>} : memref<16x256xf32, #tpu.memory_space<vmem>>, vector<16x256xf32>,
    return
  }
  func.func @transform_0(%arg0: i32) -> (i32, i32) {
    %c0_i32 = arith.constant 0 : i32
    %c0_i32_0 = arith.constant 0 : i32
    return %arg0, %c0_i32 : i32, i32
  }
  func.func @transform_1(%arg0: i32) -> (i32, i32) {
    %c0_i32 = arith.constant 0 : i32
    %c0_i32_0 = arith.constant 0 : i32
    %c0_i32_1 = arith.constant 0 : i32
    return %c0_i32, %c0_i32_0 : i32, i32
  }
  func.func @transform_2(%arg0: i32) -> (i32, i32) {
    %c0_i32 = arith.constant 0 : i32
    %c0_i32_0 = arith.constant 0 : i32
    %c0_i32_1 = arith.constant 0 : i32
    return %c0_i32, %c0_i32_0 : i32, i32
  }
  func.func @transform_3(%arg0: i32) -> (i32, i32) {
    %c0_i32 = arith.constant 0 : i32
    %c0_i32_0 = arith.constant 0 : i32
    return %arg0, %c0_i32 : i32, i32
  }
}

</mosaic_0001>

<llo_original>
// kernel: tpu_custom_call.1
$region0: #{tpu_custom_call.1}
  #allocation0 [shape = 'u32[]', space=smem, size = 0x4, offset = 0x4, fixed_abs, tag = 'smem constant byte address 0x4 - core index']
  #allocation1 [shape = 'u32[144,128]{1,0:T(1,128)}', space=vmem, size = 0x12000, scoped, tag = 'internal scratch']
  %s0 = inlined_call_operand.hbm [shape: bf16[16,128], index: 0, kind: input, shape index: {}]
  %s1 = inlined_call_operand.hbm [shape: bf16[128,256], index: 1, kind: input, shape index: {}]
  %s2 = inlined_call_operand.vmem [shape: f32[1,256], index: 2, kind: input, shape index: {}]
  %s3 = inlined_call_operand.hbm [shape: f32[16,256], index: 3, kind: output, shape index: {}]
  %s4 = sld [smem:[#allocation0]]
  $region30: #{tpu_custom_call.1} parent=0
    _
  %s6 = ssub.s32 1, %s4
  %s7 = scalar_select 0, %s6, %s4
  $region1: #{tpu_custom_call.1} parent=0
    #allocation2 [shape = 'u8[4096]{0}', space=vmem, size = 0x1000, scoped, tag = 'input window, operand 0, single buffered']
    #allocation3 [shape = 's32[1]{0}', space=sflag, size = 0x4, scoped, tag = 'scoped memory for tpu_custom_call.1']
    #allocation4 [shape = 's32[1]{0}', space=sflag, size = 0x4, scoped, tag = 'scoped memory for tpu_custom_call.1']
    #allocation5 [shape = 'u8[65536]{0}', space=vmem, size = 0x10000, scoped, tag = 'input window, operand 1, single buffered']
    #allocation6 [shape = 's32[1]{0}', space=sflag, size = 0x4, scoped, tag = 'scoped memory for tpu_custom_call.1']
    #allocation7 [shape = 'u8[16384]{0}', space=vmem, size = 0x4000, scoped, tag = 'output window, operand 0, single buffered']
    %8 = vsyncpa [#allocation3], 0
    %9 = vsyncpa [#allocation6], 0
    %10 = vsyncpa [#allocation4], 0
    // Predicated region
    $region2: #{tpu_custom_call.1} parent=1 // pred_check
      _
    $region3: #{tpu_custom_call.1} parent=1 // pred_check_branch
      %12 = sbr.rel (0) target = $region5
    $region4: #{tpu_custom_call.1} parent=1 // pred_region
      %s14 = ssub.s32 128, 128
      %15 = vsyncadd [#allocation3], %s14
      %s16 = sshll.u32 [#allocation2], 4
      %s17 = int_to_ptr.vmem [resolvable:$true] %s16
      %22 = dma.hbm_to_vmem [thread:$0]  %s0, 128, %s17, [#allocation3], 64, 64, 4
    $region5: #{tpu_custom_call.1} parent=1 // pred_fallthru
      _
    // Predicated region
    $region6: #{tpu_custom_call.1} parent=1 // pred_check
      _
    $region7: #{tpu_custom_call.1} parent=1 // pred_check_branch
      %24 = sbr.rel (0) target = $region9
    $region8: #{tpu_custom_call.1} parent=1 // pred_region
      %s26 = ssub.s32 2048, 2048
      %27 = vsyncadd [#allocation6], %s26
      %s28 = sshll.u32 [#allocation5], 4
      %s29 = int_to_ptr.vmem [resolvable:$true] %s28
      %34 = dma.hbm_to_vmem [thread:$0]  %s1, 2048, %s29, [#allocation6], 128, 128, 8
    $region9: #{tpu_custom_call.1} parent=1 // pred_fallthru
      _
    // Predicated region
    $region10: #{tpu_custom_call.1} parent=1 // pred_check
      _
    $region11: #{tpu_custom_call.1} parent=1 // pred_check_branch
      %36 = sbr.rel (0) target = $region13
    $region12: #{tpu_custom_call.1} parent=1 // pred_region
      _
    $region13: #{tpu_custom_call.1} parent=1 // pred_fallthru
      _
    // Predicated region
    $region14: #{tpu_custom_call.1} parent=1 // pred_check
      _
    $region15: #{tpu_custom_call.1} parent=1 // pred_check_branch
      %38 = sbr.rel (0) target = $region17
    $region16: #{tpu_custom_call.1} parent=1 // pred_region
      %39 = dma.done [#allocation3], 128
    $region17: #{tpu_custom_call.1} parent=1 // pred_fallthru
      _
    // Predicated region
    $region18: #{tpu_custom_call.1} parent=1 // pred_check
      _
    $region19: #{tpu_custom_call.1} parent=1 // pred_check_branch
      %41 = sbr.rel (0) target = $region21
    $region20: #{tpu_custom_call.1} parent=1 // pred_region
      %42 = dma.done [#allocation6], 2048
    $region21: #{tpu_custom_call.1} parent=1 // pred_fallthru
      _
    %v44 = vld [vmem:[#allocation2] sm:$0xf]
    %v45 = vld [vmem:[#allocation2 + $0x4] sm:$0xf]
    %v46 = vld [vmem:[#allocation5] sm:$0xff]
    %v47 = vld [vmem:[#allocation5 + $0x8] sm:$0xff]
    %v48 = vld [vmem:[#allocation5 + $0x10] sm:$0xff]
    %v49 = vld [vmem:[#allocation5 + $0x18] sm:$0xff]
    %v50 = vld [vmem:[#allocation5 + $0x20] sm:$0xff]
    %v51 = vld [vmem:[#allocation5 + $0x28] sm:$0xff]
    %v52 = vld [vmem:[#allocation5 + $0x30] sm:$0xff]
    %v53 = vld [vmem:[#allocation5 + $0x38] sm:$0xff]
    %v54 = vld [vmem:[#allocation5 + $0x40] sm:$0xff]
    %v55 = vld [vmem:[#allocation5 + $0x48] sm:$0xff]
    %v56 = vld [vmem:[#allocation5 + $0x50] sm:$0xff]
    %v57 = vld [vmem:[#allocation5 + $0x58] sm:$0xff]
    %v58 = vld [vmem:[#allocation5 + $0x60] sm:$0xff]
    %v59 = vld [vmem:[#allocation5 + $0x68] sm:$0xff]
    %v60 = vld [vmem:[#allocation5 + $0x70] sm:$0xff]
    %v61 = vld [vmem:[#allocation5 + $0x78] sm:$0xff]
    %v62 = vld [vmem:[%s2] sm:$0x3]
    %v64 = vlaneseq
    %v65 = vshrl.u32 %v64, 7
    %v66 = vsub.s32 0, %v65
    %v67 = vrot.slane %v62, %v66
    %v68 = vlaneseq
    %v69 = vshrl.u32 %v68, 7
    %v70 = vsub.s32 1, %v69
    %v71 = vrot.slane %v62, %v70
    %v76 = vunpack.c.l.b16 %v44
    %v77 = vunpack.c.l.b16 %v45
    %v78 = vpack.c.b16 %v77, %v76
    %v96 = vunpack.c.l.b16 %v46
    %v97 = vunpack.c.h.b16 %v46
    %v98 = vunpack.c.l.b16 %v47
    %v99 = vunpack.c.h.b16 %v47
    %v100 = vunpack.c.l.b16 %v48
    %v101 = vunpack.c.h.b16 %v48
    %v102 = vunpack.c.l.b16 %v49
    %v103 = vunpack.c.h.b16 %v49
    %v104 = vunpack.c.l.b16 %v50
    %v105 = vunpack.c.h.b16 %v50
    %v106 = vunpack.c.l.b16 %v51
    %v107 = vunpack.c.h.b16 %v51
    %v108 = vunpack.c.l.b16 %v52
    %v109 = vunpack.c.h.b16 %v52
    %v110 = vunpack.c.l.b16 %v53
    %v111 = vunpack.c.h.b16 %v53
    %v112 = vunpack.c.l.b16 %v54
    %v113 = vunpack.c.h.b16 %v54
    %v114 = vunpack.c.l.b16 %v55
    %v115 = vunpack.c.h.b16 %v55
    %v116 = vunpack.c.l.b16 %v56
    %v117 = vunpack.c.h.b16 %v56
    %v118 = vunpack.c.l.b16 %v57
    %v119 = vunpack.c.h.b16 %v57
    %v120 = vunpack.c.l.b16 %v58
    %v121 = vunpack.c.h.b16 %v58
    %v122 = vunpack.c.l.b16 %v59
    %v123 = vunpack.c.h.b16 %v59
    %v124 = vunpack.c.l.b16 %v60
    %v125 = vunpack.c.h.b16 %v60
    %v126 = vunpack.c.l.b16 %v61
    %v127 = vunpack.c.h.b16 %v61
    %v128 = vpack.c.b16 %v98, %v96
    %v129 = vpack.c.b16 %v99, %v97
    %v130 = vpack.c.b16 %v102, %v100
    %v131 = vpack.c.b16 %v103, %v101
    %v132 = vpack.c.b16 %v106, %v104
    %v133 = vpack.c.b16 %v107, %v105
    %v134 = vpack.c.b16 %v110, %v108
    %v135 = vpack.c.b16 %v111, %v109
    %v136 = vpack.c.b16 %v114, %v112
    %v137 = vpack.c.b16 %v115, %v113
    %v138 = vpack.c.b16 %v118, %v116
    %v139 = vpack.c.b16 %v119, %v117
    %v140 = vpack.c.b16 %v122, %v120
    %v141 = vpack.c.b16 %v123, %v121
    %v142 = vpack.c.b16 %v126, %v124
    %v143 = vpack.c.b16 %v127, %v125
    %160 = vmatprep.subr.bf16.mxu0 %v129
    %161 = vmatpush1.bf16.msra.mxu0 %v128
    %162 = vmatprep.subr.bf16.mxu0 %v131
    %163 = vmatpush1.bf16.msra.mxu0 %v130
    %164 = vmatprep.subr.bf16.mxu0 %v133
    %165 = vmatpush1.bf16.msra.mxu0 %v132
    %166 = vmatprep.subr.bf16.mxu0 %v135
    %167 = vmatpush1.bf16.msra.mxu0 %v134
    %168 = vmatprep.subr.bf16.mxu0 %v137
    %169 = vmatpush1.bf16.msra.mxu0 %v136
    %170 = vmatprep.subr.bf16.mxu0 %v139
    %171 = vmatpush1.bf16.msra.mxu0 %v138
    %172 = vmatprep.subr.bf16.mxu0 %v141
    %173 = vmatpush1.bf16.msra.mxu0 %v140
    %174 = vmatprep.subr.bf16.mxu0 %v143
    %175 = vmatpush1.bf16.msra.mxu0 %v142
    %176 = vmatprep.subr.bf16.mxu0 0
    %177 = vmatpush1.bf16.msra.mxu0 0
    %178 = vmatprep.subr.bf16.mxu0 0
    %179 = vmatpush1.bf16.msra.mxu0 0
    %180 = vmatprep.subr.bf16.mxu0 0
    %181 = vmatpush1.bf16.msra.mxu0 0
    %182 = vmatprep.subr.bf16.mxu0 0
    %183 = vmatpush1.bf16.msra.mxu0 0
    %184 = vmatprep.subr.bf16.mxu0 0
    %185 = vmatpush1.bf16.msra.mxu0 0
    %186 = vmatprep.subr.bf16.mxu0 0
    %187 = vmatpush1.bf16.msra.mxu0 0
    %188 = vmatprep.subr.bf16.mxu0 0
    %189 = vmatpush1.bf16.msra.mxu0 0
    %190 = vmatprep.subr.bf16.mxu0 0
    %191 = vmatpush1.bf16.msra.mxu0 0
    %192 = vmatprep.mubr.bf16.mxu0 0
    %193 = vmatmul.mubr.bf16.gmra.mrb[0].mxu0 %v78
    %v194 = vpop.f32.mrb[0].mxu0
    %v195 = vadd.f32 %v67, %v194
    %v196 = vpop.f32.mrb[0].mxu0
    %v197 = vadd.f32 %v71, %v196
    %v198 = vpop.f32.mrb[0].mxu0
    %v199 = vadd.f32 %v67, %v198
    %v200 = vpop.f32.mrb[0].mxu0
    %v201 = vadd.f32 %v71, %v200
    %202 = vdwg.mxu0
    %v203 = vsub.f32 0.0, %v195
    %v204 = vsub.f32 0.0, %v197
    %v205 = vsub.f32 0.0, %v199
    %v206 = vsub.f32 0.0, %v201
    %v207 = vmul.f32 %v203, 1.442695
    %v208 = vpow.pop %v207
    %v209 = vmul.f32 %v204, 1.442695
    %v210 = vpow.pop %v209
    %v211 = vmul.f32 %v205, 1.442695
    %v212 = vpow.pop %v211
    %v213 = vmul.f32 %v206, 1.442695
    %v214 = vpow.pop %v213
    %v215 = vadd.f32 %v208, 1.0
    %v216 = vadd.f32 %v210, 1.0
    %v217 = vadd.f32 %v212, 1.0
    %v218 = vadd.f32 %v214, 1.0
    %v219 = vrcp.pop %v215
    %v220 = vrcp.pop %v216
    %v221 = vrcp.pop %v217
    %v222 = vrcp.pop %v218
    %v223 = vmul.f32 %v195, %v219
    %v224 = vmul.f32 %v197, %v220
    %v225 = vmul.f32 %v199, %v221
    %v226 = vmul.f32 %v201, %v222
    %227 = vst [vmem:[#allocation7] sm:$0xff] %v223
    %228 = vst [vmem:[#allocation7 + $0x8] sm:$0xff] %v224
    %229 = vst [vmem:[#allocation7 + $0x10] sm:$0xff] %v225
    %230 = vst [vmem:[#allocation7 + $0x18] sm:$0xff] %v226
    // Predicated region
    $region22: #{tpu_custom_call.1} parent=1 // pred_check
      _
    $region23: #{tpu_custom_call.1} parent=1 // pred_check_branch
      %232 = sbr.rel (0) target = $region25
    $region24: #{tpu_custom_call.1} parent=1 // pred_region
      %s234 = ssub.s32 512, 512
      %235 = vsyncadd [#allocation4], %s234
      %s236 = sshll.u32 [#allocation7], 4
      %s237 = int_to_ptr.vmem [resolvable:$true] %s236
      %242 = dma.vmem_to_hbm [thread:$0]  %s237, 512, %s3, [#allocation4], 256, 256, 16
    $region25: #{tpu_custom_call.1} parent=1 // pred_fallthru
      _
    // Predicated region
    $region26: #{tpu_custom_call.1} parent=1 // pred_check
      _
    $region27: #{tpu_custom_call.1} parent=1 // pred_check_branch
      %244 = sbr.rel (0) target = $region29
    $region28: #{tpu_custom_call.1} parent=1 // pred_region
      %245 = dma.done [#allocation4], 512
    $region29: #{tpu_custom_call.1} parent=1 // pred_fallthru
      _
    %246 = vsyncpa [#allocation3], 1
    %247 = vsyncpa [#allocation6], 1
    %248 = vsyncpa [#allocation4], 1

</llo_original>
